<compile_context>
chip_gen: v6e
topology: v6e:2x2x1
jax: 0.10.0
libtpu: 0.0.40
codegen_flags: <defaults>
</compile_context>

<pallas_src>
import functools

import jax
import jax.numpy as jnp
from jax.experimental import pallas as pl
from jax.experimental.pallas import tpu as pltpu


def embedding_kernel(ids_ref, pe_ref, table_ref, out_ref, buf_ref, sem_ref,
                     *, seq_len):
    """One grid step == one batch element: gather seq_len embedding rows via
    DMA (indices come from SMEM-prefetched token ids), then add the PE."""
    b = pl.program_id(0)

    # Issue every row gather for this batch element, then wait on all of them,
    # so the small per-row DMAs overlap instead of serializing.
    copies = []
    for s in range(seq_len):                     # static unroll (seq_len small)
        tok = ids_ref[b, s]                      # scalar read from SMEM
        cp = pltpu.make_async_copy(table_ref.at[tok],   # (D,) row in HBM
                                   buf_ref.at[s],       # (D,) row in VMEM
                                   sem_ref.at[s])
        cp.start()
        copies.append(cp)
    for cp in copies:
        cp.wait()

    out_ref[0] = (buf_ref[...] + pe_ref[...]).astype(out_ref.dtype)


def positional_encoding(seq_length, d_model):
    """Exact port of PositionalEncoding._reset_parameters."""
    positions = jnp.arange(seq_length, dtype=jnp.float32)[:, None]   # (S, 1)
    dims = jnp.arange(d_model, dtype=jnp.float32)                    # (D,)
    denom = jnp.power(10000.0, (2.0 / d_model) * dims)
    args = positions / denom                                         # (S, D)
    even = (jnp.arange(d_model) % 2) == 0
    # pe[:, 0::2] = sin(args)[:, 0::2] ; pe[:, 1::2] = cos(args)[:, 1::2]
    return jnp.where(even[None, :], jnp.sin(args), jnp.cos(args))    # (S, D)


def embedding_forward(ids, table, pe_full):
    """ids: (B, S) int32 token indices; table: (vocab, D); pe_full: (seq_len, D)."""
    B, S = ids.shape
    _, D = table.shape
    pe = pe_full[:S]  # PositionalEncoding.forward: self.pe[:, :x.size(1)]

    kernel = functools.partial(embedding_kernel, seq_len=S)
    grid_spec = pltpu.PrefetchScalarGridSpec(
        num_scalar_prefetch=1,                       # token ids -> SMEM
        grid=(B,),
        in_specs=[
            pl.BlockSpec((S, D), lambda b, ids_ref: (0, 0)),  # pe (constant block)
            pl.BlockSpec(memory_space=pl.ANY),                # table stays in HBM
        ],
        out_specs=pl.BlockSpec((1, S, D), lambda b, ids_ref: (b, 0, 0)),
        scratch_shapes=[
            pltpu.VMEM((S, D), jnp.float32),          # gathered embedding rows
            pltpu.SemaphoreType.DMA((S,)),            # one sem per in-flight DMA
        ],
    )
    return pl.pallas_call(
        kernel,
        out_shape=jax.ShapeDtypeStruct((B, S, D), jnp.float32),
        grid_spec=grid_spec,
        compiler_params=pltpu.CompilerParams(
            dimension_semantics=("parallel",)),       # megacore split on v7x
    )(ids.astype(jnp.int32), pe, table)


if __name__ == "__main__":
    d_model, vocab_size, seq_length = 32, 64, 8
    B, S = 2, 8
    enable_padding = False   # nn.Embedding(padding_idx=0): forward-only effect
                             # is just a zero row-0, handled at init below.

    key = jax.random.PRNGKey(0)
    k_tab, k_ids = jax.random.split(key)
    table = jax.random.normal(k_tab, (vocab_size, d_model), jnp.float32)  # N(0,1) like nn.Embedding
    if enable_padding:
        table = table.at[0].set(0.0)
    ids = jax.random.randint(k_ids, (B, S), 0, vocab_size, dtype=jnp.int32)
    pe_full = positional_encoding(seq_length, d_model)

    out = embedding_forward(ids, table, pe_full)
    out = jax.block_until_ready(out)

    # pure-JAX reference
    ref = table[ids] + pe_full[None, :S, :]
    assert out.shape == (B, S, d_model)
    assert jnp.allclose(out, ref, atol=1e-6, rtol=1e-6), "mismatch vs reference"

    print("KERNEL_OK")
</pallas_src>

<mosaic_0001>
module attributes {stable_mosaic.version = 11 : i64} {
  func.func @embedding_kernel(%arg0: i32, %arg1: memref<2x8xi32, #tpu.memory_space<smem>>, %arg2: memref<8x32xf32, #tpu.memory_space<vmem>>, %arg3: memref<64x32xf32, #tpu.memory_space<any>>, %arg4: memref<1x8x32xf32, #tpu.memory_space<vmem>>, %arg5: memref<8x32xf32, #tpu.memory_space<vmem>>, %arg6: memref<8x!tpu.dma_semaphore, #tpu.memory_space<semaphore_mem>>) attributes {dimension_semantics = [#tpu.dimension_semantics<parallel>], iteration_bounds = array<i64: 2>, scalar_prefetch = 1 : i64, scratch_operands = 2 : i64, tpu.core_type = #tpu.core_type<tc>, window_params = [{pipeline_mode = #tpu.pipeline_mode<synchronous>, transform_indices = @transform_0, window_bounds = array<i64: 8, 32>}, {}, {transform_indices = @transform_2, window_bounds = array<i64: 1, 8, 32>}]} {
    %0 = arith.index_cast %arg0 : i32 to index
    %c0 = arith.constant 0 : index
    %1 = memref.load %arg1[%0, %c0] : memref<2x8xi32, #tpu.memory_space<smem>>
    %c0_i32 = arith.constant 0 : i32
    %c0_i32_0 = arith.constant 0 : i32
    %c0_i32_1 = arith.constant 0 : i32
    %2 = tpu.memref_slice %arg3[%1, %c0_i32_1] : memref<64x32xf32, #tpu.memory_space<any>> -> memref<1x32xf32, #tpu.memory_space<any>>
    %3 = tpu.memref_squeeze %2 : memref<1x32xf32, #tpu.memory_space<any>> -> memref<32xf32, #tpu.memory_space<any>>
    %c0_i32_2 = arith.constant 0 : i32
    %4 = tpu.memref_slice %arg5[%c0_i32, %c0_i32_2] : memref<8x32xf32, #tpu.memory_space<vmem>> -> memref<1x32xf32, #tpu.memory_space<vmem>>
    %5 = tpu.memref_squeeze %4 : memref<1x32xf32, #tpu.memory_space<vmem>> -> memref<32xf32, #tpu.memory_space<vmem>>
    %6 = tpu.memref_slice %arg6[%c0_i32_0] : memref<8x!tpu.dma_semaphore, #tpu.memory_space<semaphore_mem>> -> memref<1x!tpu.dma_semaphore, #tpu.memory_space<semaphore_mem>>
    %7 = tpu.memref_squeeze %6 : memref<1x!tpu.dma_semaphore, #tpu.memory_space<semaphore_mem>> -> memref<!tpu.dma_semaphore, #tpu.memory_space<semaphore_mem>>
    tpu.enqueue_dma source(%3 : memref<32xf32, #tpu.memory_space<any>>) target(%5 : memref<32xf32, #tpu.memory_space<vmem>>) target_semaphore(%7 : memref<!tpu.dma_semaphore, #tpu.memory_space<semaphore_mem>>)
    %8 = arith.index_cast %arg0 : i32 to index
    %c1 = arith.constant 1 : index
    %9 = memref.load %arg1[%8, %c1] : memref<2x8xi32, #tpu.memory_space<smem>>
    %c1_i32 = arith.constant 1 : i32
    %c1_i32_3 = arith.constant 1 : i32
    %c0_i32_4 = arith.constant 0 : i32
    %10 = tpu.memref_slice %arg3[%9, %c0_i32_4] : memref<64x32xf32, #tpu.memory_space<any>> -> memref<1x32xf32, #tpu.memory_space<any>>
    %11 = tpu.memref_squeeze %10 : memref<1x32xf32, #tpu.memory_space<any>> -> memref<32xf32, #tpu.memory_space<any>>
    %c0_i32_5 = arith.constant 0 : i32
    %12 = tpu.memref_slice %arg5[%c1_i32, %c0_i32_5] : memref<8x32xf32, #tpu.memory_space<vmem>> -> memref<1x32xf32, #tpu.memory_space<vmem>>
    %13 = tpu.memref_squeeze %12 : memref<1x32xf32, #tpu.memory_space<vmem>> -> memref<32xf32, #tpu.memory_space<vmem>>
    %14 = tpu.memref_slice %arg6[%c1_i32_3] : memref<8x!tpu.dma_semaphore, #tpu.memory_space<semaphore_mem>> -> memref<1x!tpu.dma_semaphore, #tpu.memory_space<semaphore_mem>>
    %15 = tpu.memref_squeeze %14 : memref<1x!tpu.dma_semaphore, #tpu.memory_space<semaphore_mem>> -> memref<!tpu.dma_semaphore, #tpu.memory_space<semaphore_mem>>
    tpu.enqueue_dma source(%11 : memref<32xf32, #tpu.memory_space<any>>) target(%13 : memref<32xf32, #tpu.memory_space<vmem>>) target_semaphore(%15 : memref<!tpu.dma_semaphore, #tpu.memory_space<semaphore_mem>>)
    %16 = arith.index_cast %arg0 : i32 to index
    %c2 = arith.constant 2 : index
    %17 = memref.load %arg1[%16, %c2] : memref<2x8xi32, #tpu.memory_space<smem>>
    %c2_i32 = arith.constant 2 : i32
    %c2_i32_6 = arith.constant 2 : i32
    %c0_i32_7 = arith.constant 0 : i32
    %18 = tpu.memref_slice %arg3[%17, %c0_i32_7] : memref<64x32xf32, #tpu.memory_space<any>> -> memref<1x32xf32, #tpu.memory_space<any>>
    %19 = tpu.memref_squeeze %18 : memref<1x32xf32, #tpu.memory_space<any>> -> memref<32xf32, #tpu.memory_space<any>>
    %c0_i32_8 = arith.constant 0 : i32
    %20 = tpu.memref_slice %arg5[%c2_i32, %c0_i32_8] : memref<8x32xf32, #tpu.memory_space<vmem>> -> memref<1x32xf32, #tpu.memory_space<vmem>>
    %21 = tpu.memref_squeeze %20 : memref<1x32xf32, #tpu.memory_space<vmem>> -> memref<32xf32, #tpu.memory_space<vmem>>
    %22 = tpu.memref_slice %arg6[%c2_i32_6] : memref<8x!tpu.dma_semaphore, #tpu.memory_space<semaphore_mem>> -> memref<1x!tpu.dma_semaphore, #tpu.memory_space<semaphore_mem>>
    %23 = tpu.memref_squeeze %22 : memref<1x!tpu.dma_semaphore, #tpu.memory_space<semaphore_mem>> -> memref<!tpu.dma_semaphore, #tpu.memory_space<semaphore_mem>>
    tpu.enqueue_dma source(%19 : memref<32xf32, #tpu.memory_space<any>>) target(%21 : memref<32xf32, #tpu.memory_space<vmem>>) target_semaphore(%23 : memref<!tpu.dma_semaphore, #tpu.memory_space<semaphore_mem>>)
    %24 = arith.index_cast %arg0 : i32 to index
    %c3 = arith.constant 3 : index
    %25 = memref.load %arg1[%24, %c3] : memref<2x8xi32, #tpu.memory_space<smem>>
    %c3_i32 = arith.constant 3 : i32
    %c3_i32_9 = arith.constant 3 : i32
    %c0_i32_10 = arith.constant 0 : i32
    %26 = tpu.memref_slice %arg3[%25, %c0_i32_10] : memref<64x32xf32, #tpu.memory_space<any>> -> memref<1x32xf32, #tpu.memory_space<any>>
    %27 = tpu.memref_squeeze %26 : memref<1x32xf32, #tpu.memory_space<any>> -> memref<32xf32, #tpu.memory_space<any>>
    %c0_i32_11 = arith.constant 0 : i32
    %28 = tpu.memref_slice %arg5[%c3_i32, %c0_i32_11] : memref<8x32xf32, #tpu.memory_space<vmem>> -> memref<1x32xf32, #tpu.memory_space<vmem>>
    %29 = tpu.memref_squeeze %28 : memref<1x32xf32, #tpu.memory_space<vmem>> -> memref<32xf32, #tpu.memory_space<vmem>>
    %30 = tpu.memref_slice %arg6[%c3_i32_9] : memref<8x!tpu.dma_semaphore, #tpu.memory_space<semaphore_mem>> -> memref<1x!tpu.dma_semaphore, #tpu.memory_space<semaphore_mem>>
    %31 = tpu.memref_squeeze %30 : memref<1x!tpu.dma_semaphore, #tpu.memory_space<semaphore_mem>> -> memref<!tpu.dma_semaphore, #tpu.memory_space<semaphore_mem>>
    tpu.enqueue_dma source(%27 : memref<32xf32, #tpu.memory_space<any>>) target(%29 : memref<32xf32, #tpu.memory_space<vmem>>) target_semaphore(%31 : memref<!tpu.dma_semaphore, #tpu.memory_space<semaphore_mem>>)
    %32 = arith.index_cast %arg0 : i32 to index
    %c4 = arith.constant 4 : index
    %33 = memref.load %arg1[%32, %c4] : memref<2x8xi32, #tpu.memory_space<smem>>
    %c4_i32 = arith.constant 4 : i32
    %c4_i32_12 = arith.constant 4 : i32
    %c0_i32_13 = arith.constant 0 : i32
    %34 = tpu.memref_slice %arg3[%33, %c0_i32_13] : memref<64x32xf32, #tpu.memory_space<any>> -> memref<1x32xf32, #tpu.memory_space<any>>
    %35 = tpu.memref_squeeze %34 : memref<1x32xf32, #tpu.memory_space<any>> -> memref<32xf32, #tpu.memory_space<any>>
    %c0_i32_14 = arith.constant 0 : i32
    %36 = tpu.memref_slice %arg5[%c4_i32, %c0_i32_14] : memref<8x32xf32, #tpu.memory_space<vmem>> -> memref<1x32xf32, #tpu.memory_space<vmem>>
    %37 = tpu.memref_squeeze %36 : memref<1x32xf32, #tpu.memory_space<vmem>> -> memref<32xf32, #tpu.memory_space<vmem>>
    %38 = tpu.memref_slice %arg6[%c4_i32_12] : memref<8x!tpu.dma_semaphore, #tpu.memory_space<semaphore_mem>> -> memref<1x!tpu.dma_semaphore, #tpu.memory_space<semaphore_mem>>
    %39 = tpu.memref_squeeze %38 : memref<1x!tpu.dma_semaphore, #tpu.memory_space<semaphore_mem>> -> memref<!tpu.dma_semaphore, #tpu.memory_space<semaphore_mem>>
    tpu.enqueue_dma source(%35 : memref<32xf32, #tpu.memory_space<any>>) target(%37 : memref<32xf32, #tpu.memory_space<vmem>>) target_semaphore(%39 : memref<!tpu.dma_semaphore, #tpu.memory_space<semaphore_mem>>)
    %40 = arith.index_cast %arg0 : i32 to index
    %c5 = arith.constant 5 : index
    %41 = memref.load %arg1[%40, %c5] : memref<2x8xi32, #tpu.memory_space<smem>>
    %c5_i32 = arith.constant 5 : i32
    %c5_i32_15 = arith.constant 5 : i32
    %c0_i32_16 = arith.constant 0 : i32
    %42 = tpu.memref_slice %arg3[%41, %c0_i32_16] : memref<64x32xf32, #tpu.memory_space<any>> -> memref<1x32xf32, #tpu.memory_space<any>>
    %43 = tpu.memref_squeeze %42 : memref<1x32xf32, #tpu.memory_space<any>> -> memref<32xf32, #tpu.memory_space<any>>
    %c0_i32_17 = arith.constant 0 : i32
    %44 = tpu.memref_slice %arg5[%c5_i32, %c0_i32_17] : memref<8x32xf32, #tpu.memory_space<vmem>> -> memref<1x32xf32, #tpu.memory_space<vmem>>
    %45 = tpu.memref_squeeze %44 : memref<1x32xf32, #tpu.memory_space<vmem>> -> memref<32xf32, #tpu.memory_space<vmem>>
    %46 = tpu.memref_slice %arg6[%c5_i32_15] : memref<8x!tpu.dma_semaphore, #tpu.memory_space<semaphore_mem>> -> memref<1x!tpu.dma_semaphore, #tpu.memory_space<semaphore_mem>>
    %47 = tpu.memref_squeeze %46 : memref<1x!tpu.dma_semaphore, #tpu.memory_space<semaphore_mem>> -> memref<!tpu.dma_semaphore, #tpu.memory_space<semaphore_mem>>
    tpu.enqueue_dma source(%43 : memref<32xf32, #tpu.memory_space<any>>) target(%45 : memref<32xf32, #tpu.memory_space<vmem>>) target_semaphore(%47 : memref<!tpu.dma_semaphore, #tpu.memory_space<semaphore_mem>>)
    %48 = arith.index_cast %arg0 : i32 to index
    %c6 = arith.constant 6 : index
    %49 = memref.load %arg1[%48, %c6] : memref<2x8xi32, #tpu.memory_space<smem>>
    %c6_i32 = arith.constant 6 : i32
    %c6_i32_18 = arith.constant 6 : i32
    %c0_i32_19 = arith.constant 0 : i32
    %50 = tpu.memref_slice %arg3[%49, %c0_i32_19] : memref<64x32xf32, #tpu.memory_space<any>> -> memref<1x32xf32, #tpu.memory_space<any>>
    %51 = tpu.memref_squeeze %50 : memref<1x32xf32, #tpu.memory_space<any>> -> memref<32xf32, #tpu.memory_space<any>>
    %c0_i32_20 = arith.constant 0 : i32
    %52 = tpu.memref_slice %arg5[%c6_i32, %c0_i32_20] : memref<8x32xf32, #tpu.memory_space<vmem>> -> memref<1x32xf32, #tpu.memory_space<vmem>>
    %53 = tpu.memref_squeeze %52 : memref<1x32xf32, #tpu.memory_space<vmem>> -> memref<32xf32, #tpu.memory_space<vmem>>
    %54 = tpu.memref_slice %arg6[%c6_i32_18] : memref<8x!tpu.dma_semaphore, #tpu.memory_space<semaphore_mem>> -> memref<1x!tpu.dma_semaphore, #tpu.memory_space<semaphore_mem>>
    %55 = tpu.memref_squeeze %54 : memref<1x!tpu.dma_semaphore, #tpu.memory_space<semaphore_mem>> -> memref<!tpu.dma_semaphore, #tpu.memory_space<semaphore_mem>>
    tpu.enqueue_dma source(%51 : memref<32xf32, #tpu.memory_space<any>>) target(%53 : memref<32xf32, #tpu.memory_space<vmem>>) target_semaphore(%55 : memref<!tpu.dma_semaphore, #tpu.memory_space<semaphore_mem>>)
    %56 = arith.index_cast %arg0 : i32 to index
    %c7 = arith.constant 7 : index
    %57 = memref.load %arg1[%56, %c7] : memref<2x8xi32, #tpu.memory_space<smem>>
    %c7_i32 = arith.constant 7 : i32
    %c7_i32_21 = arith.constant 7 : i32
    %c0_i32_22 = arith.constant 0 : i32
    %58 = tpu.memref_slice %arg3[%57, %c0_i32_22] : memref<64x32xf32, #tpu.memory_space<any>> -> memref<1x32xf32, #tpu.memory_space<any>>
    %59 = tpu.memref_squeeze %58 : memref<1x32xf32, #tpu.memory_space<any>> -> memref<32xf32, #tpu.memory_space<any>>
    %c0_i32_23 = arith.constant 0 : i32
    %60 = tpu.memref_slice %arg5[%c7_i32, %c0_i32_23] : memref<8x32xf32, #tpu.memory_space<vmem>> -> memref<1x32xf32, #tpu.memory_space<vmem>>
    %61 = tpu.memref_squeeze %60 : memref<1x32xf32, #tpu.memory_space<vmem>> -> memref<32xf32, #tpu.memory_space<vmem>>
    %62 = tpu.memref_slice %arg6[%c7_i32_21] : memref<8x!tpu.dma_semaphore, #tpu.memory_space<semaphore_mem>> -> memref<1x!tpu.dma_semaphore, #tpu.memory_space<semaphore_mem>>
    %63 = tpu.memref_squeeze %62 : memref<1x!tpu.dma_semaphore, #tpu.memory_space<semaphore_mem>> -> memref<!tpu.dma_semaphore, #tpu.memory_space<semaphore_mem>>
    tpu.enqueue_dma source(%59 : memref<32xf32, #tpu.memory_space<any>>) target(%61 : memref<32xf32, #tpu.memory_space<vmem>>) target_semaphore(%63 : memref<!tpu.dma_semaphore, #tpu.memory_space<semaphore_mem>>)
    %c0_i32_24 = arith.constant 0 : i32
    %c0_i32_25 = arith.constant 0 : i32
    %c0_i32_26 = arith.constant 0 : i32
    %64 = tpu.memref_slice %arg3[%1, %c0_i32_26] : memref<64x32xf32, #tpu.memory_space<any>> -> memref<1x32xf32, #tpu.memory_space<any>>
    %65 = tpu.memref_squeeze %64 : memref<1x32xf32, #tpu.memory_space<any>> -> memref<32xf32, #tpu.memory_space<any>>
    %c0_i32_27 = arith.constant 0 : i32
    %66 = tpu.memref_slice %arg5[%c0_i32_24, %c0_i32_27] : memref<8x32xf32, #tpu.memory_space<vmem>> -> memref<1x32xf32, #tpu.memory_space<vmem>>
    %67 = tpu.memref_squeeze %66 : memref<1x32xf32, #tpu.memory_space<vmem>> -> memref<32xf32, #tpu.memory_space<vmem>>
    %68 = tpu.memref_slice %arg6[%c0_i32_25] : memref<8x!tpu.dma_semaphore, #tpu.memory_space<semaphore_mem>> -> memref<1x!tpu.dma_semaphore, #tpu.memory_space<semaphore_mem>>
    %69 = tpu.memref_squeeze %68 : memref<1x!tpu.dma_semaphore, #tpu.memory_space<semaphore_mem>> -> memref<!tpu.dma_semaphore, #tpu.memory_space<semaphore_mem>>
    tpu.wait_dma2 semaphore(%69 : memref<!tpu.dma_semaphore, #tpu.memory_space<semaphore_mem>>) src(%65 : memref<32xf32, #tpu.memory_space<any>>) dst(%67 : memref<32xf32, #tpu.memory_space<vmem>>)
    %c1_i32_28 = arith.constant 1 : i32
    %c1_i32_29 = arith.constant 1 : i32
    %c0_i32_30 = arith.constant 0 : i32
    %70 = tpu.memref_slice %arg3[%9, %c0_i32_30] : memref<64x32xf32, #tpu.memory_space<any>> -> memref<1x32xf32, #tpu.memory_space<any>>
    %71 = tpu.memref_squeeze %70 : memref<1x32xf32, #tpu.memory_space<any>> -> memref<32xf32, #tpu.memory_space<any>>
    %c0_i32_31 = arith.constant 0 : i32
    %72 = tpu.memref_slice %arg5[%c1_i32_28, %c0_i32_31] : memref<8x32xf32, #tpu.memory_space<vmem>> -> memref<1x32xf32, #tpu.memory_space<vmem>>
    %73 = tpu.memref_squeeze %72 : memref<1x32xf32, #tpu.memory_space<vmem>> -> memref<32xf32, #tpu.memory_space<vmem>>
    %74 = tpu.memref_slice %arg6[%c1_i32_29] : memref<8x!tpu.dma_semaphore, #tpu.memory_space<semaphore_mem>> -> memref<1x!tpu.dma_semaphore, #tpu.memory_space<semaphore_mem>>
    %75 = tpu.memref_squeeze %74 : memref<1x!tpu.dma_semaphore, #tpu.memory_space<semaphore_mem>> -> memref<!tpu.dma_semaphore, #tpu.memory_space<semaphore_mem>>
    tpu.wait_dma2 semaphore(%75 : memref<!tpu.dma_semaphore, #tpu.memory_space<semaphore_mem>>) src(%71 : memref<32xf32, #tpu.memory_space<any>>) dst(%73 : memref<32xf32, #tpu.memory_space<vmem>>)
    %c2_i32_32 = arith.constant 2 : i32
    %c2_i32_33 = arith.constant 2 : i32
    %c0_i32_34 = arith.constant 0 : i32
    %76 = tpu.memref_slice %arg3[%17, %c0_i32_34] : memref<64x32xf32, #tpu.memory_space<any>> -> memref<1x32xf32, #tpu.memory_space<any>>
    %77 = tpu.memref_squeeze %76 : memref<1x32xf32, #tpu.memory_space<any>> -> memref<32xf32, #tpu.memory_space<any>>
    %c0_i32_35 = arith.constant 0 : i32
    %78 = tpu.memref_slice %arg5[%c2_i32_32, %c0_i32_35] : memref<8x32xf32, #tpu.memory_space<vmem>> -> memref<1x32xf32, #tpu.memory_space<vmem>>
    %79 = tpu.memref_squeeze %78 : memref<1x32xf32, #tpu.memory_space<vmem>> -> memref<32xf32, #tpu.memory_space<vmem>>
    %80 = tpu.memref_slice %arg6[%c2_i32_33] : memref<8x!tpu.dma_semaphore, #tpu.memory_space<semaphore_mem>> -> memref<1x!tpu.dma_semaphore, #tpu.memory_space<semaphore_mem>>
    %81 = tpu.memref_squeeze %80 : memref<1x!tpu.dma_semaphore, #tpu.memory_space<semaphore_mem>> -> memref<!tpu.dma_semaphore, #tpu.memory_space<semaphore_mem>>
    tpu.wait_dma2 semaphore(%81 : memref<!tpu.dma_semaphore, #tpu.memory_space<semaphore_mem>>) src(%77 : memref<32xf32, #tpu.memory_space<any>>) dst(%79 : memref<32xf32, #tpu.memory_space<vmem>>)
    %c3_i32_36 = arith.constant 3 : i32
    %c3_i32_37 = arith.constant 3 : i32
    %c0_i32_38 = arith.constant 0 : i32
    %82 = tpu.memref_slice %arg3[%25, %c0_i32_38] : memref<64x32xf32, #tpu.memory_space<any>> -> memref<1x32xf32, #tpu.memory_space<any>>
    %83 = tpu.memref_squeeze %82 : memref<1x32xf32, #tpu.memory_space<any>> -> memref<32xf32, #tpu.memory_space<any>>
    %c0_i32_39 = arith.constant 0 : i32
    %84 = tpu.memref_slice %arg5[%c3_i32_36, %c0_i32_39] : memref<8x32xf32, #tpu.memory_space<vmem>> -> memref<1x32xf32, #tpu.memory_space<vmem>>
    %85 = tpu.memref_squeeze %84 : memref<1x32xf32, #tpu.memory_space<vmem>> -> memref<32xf32, #tpu.memory_space<vmem>>
    %86 = tpu.memref_slice %arg6[%c3_i32_37] : memref<8x!tpu.dma_semaphore, #tpu.memory_space<semaphore_mem>> -> memref<1x!tpu.dma_semaphore, #tpu.memory_space<semaphore_mem>>
    %87 = tpu.memref_squeeze %86 : memref<1x!tpu.dma_semaphore, #tpu.memory_space<semaphore_mem>> -> memref<!tpu.dma_semaphore, #tpu.memory_space<semaphore_mem>>
    tpu.wait_dma2 semaphore(%87 : memref<!tpu.dma_semaphore, #tpu.memory_space<semaphore_mem>>) src(%83 : memref<32xf32, #tpu.memory_space<any>>) dst(%85 : memref<32xf32, #tpu.memory_space<vmem>>)
    %c4_i32_40 = arith.constant 4 : i32
    %c4_i32_41 = arith.constant 4 : i32
    %c0_i32_42 = arith.constant 0 : i32
    %88 = tpu.memref_slice %arg3[%33, %c0_i32_42] : memref<64x32xf32, #tpu.memory_space<any>> -> memref<1x32xf32, #tpu.memory_space<any>>
    %89 = tpu.memref_squeeze %88 : memref<1x32xf32, #tpu.memory_space<any>> -> memref<32xf32, #tpu.memory_space<any>>
    %c0_i32_43 = arith.constant 0 : i32
    %90 = tpu.memref_slice %arg5[%c4_i32_40, %c0_i32_43] : memref<8x32xf32, #tpu.memory_space<vmem>> -> memref<1x32xf32, #tpu.memory_space<vmem>>
    %91 = tpu.memref_squeeze %90 : memref<1x32xf32, #tpu.memory_space<vmem>> -> memref<32xf32, #tpu.memory_space<vmem>>
    %92 = tpu.memref_slice %arg6[%c4_i32_41] : memref<8x!tpu.dma_semaphore, #tpu.memory_space<semaphore_mem>> -> memref<1x!tpu.dma_semaphore, #tpu.memory_space<semaphore_mem>>
    %93 = tpu.memref_squeeze %92 : memref<1x!tpu.dma_semaphore, #tpu.memory_space<semaphore_mem>> -> memref<!tpu.dma_semaphore, #tpu.memory_space<semaphore_mem>>
    tpu.wait_dma2 semaphore(%93 : memref<!tpu.dma_semaphore, #tpu.memory_space<semaphore_mem>>) src(%89 : memref<32xf32, #tpu.memory_space<any>>) dst(%91 : memref<32xf32, #tpu.memory_space<vmem>>)
    %c5_i32_44 = arith.constant 5 : i32
    %c5_i32_45 = arith.constant 5 : i32
    %c0_i32_46 = arith.constant 0 : i32
    %94 = tpu.memref_slice %arg3[%41, %c0_i32_46] : memref<64x32xf32, #tpu.memory_space<any>> -> memref<1x32xf32, #tpu.memory_space<any>>
    %95 = tpu.memref_squeeze %94 : memref<1x32xf32, #tpu.memory_space<any>> -> memref<32xf32, #tpu.memory_space<any>>
    %c0_i32_47 = arith.constant 0 : i32
    %96 = tpu.memref_slice %arg5[%c5_i32_44, %c0_i32_47] : memref<8x32xf32, #tpu.memory_space<vmem>> -> memref<1x32xf32, #tpu.memory_space<vmem>>
    %97 = tpu.memref_squeeze %96 : memref<1x32xf32, #tpu.memory_space<vmem>> -> memref<32xf32, #tpu.memory_space<vmem>>
    %98 = tpu.memref_slice %arg6[%c5_i32_45] : memref<8x!tpu.dma_semaphore, #tpu.memory_space<semaphore_mem>> -> memref<1x!tpu.dma_semaphore, #tpu.memory_space<semaphore_mem>>
    %99 = tpu.memref_squeeze %98 : memref<1x!tpu.dma_semaphore, #tpu.memory_space<semaphore_mem>> -> memref<!tpu.dma_semaphore, #tpu.memory_space<semaphore_mem>>
    tpu.wait_dma2 semaphore(%99 : memref<!tpu.dma_semaphore, #tpu.memory_space<semaphore_mem>>) src(%95 : memref<32xf32, #tpu.memory_space<any>>) dst(%97 : memref<32xf32, #tpu.memory_space<vmem>>)
    %c6_i32_48 = arith.constant 6 : i32
    %c6_i32_49 = arith.constant 6 : i32
    %c0_i32_50 = arith.constant 0 : i32
    %100 = tpu.memref_slice %arg3[%49, %c0_i32_50] : memref<64x32xf32, #tpu.memory_space<any>> -> memref<1x32xf32, #tpu.memory_space<any>>
    %101 = tpu.memref_squeeze %100 : memref<1x32xf32, #tpu.memory_space<any>> -> memref<32xf32, #tpu.memory_space<any>>
    %c0_i32_51 = arith.constant 0 : i32
    %102 = tpu.memref_slice %arg5[%c6_i32_48, %c0_i32_51] : memref<8x32xf32, #tpu.memory_space<vmem>> -> memref<1x32xf32, #tpu.memory_space<vmem>>
    %103 = tpu.memref_squeeze %102 : memref<1x32xf32, #tpu.memory_space<vmem>> -> memref<32xf32, #tpu.memory_space<vmem>>
    %104 = tpu.memref_slice %arg6[%c6_i32_49] : memref<8x!tpu.dma_semaphore, #tpu.memory_space<semaphore_mem>> -> memref<1x!tpu.dma_semaphore, #tpu.memory_space<semaphore_mem>>
    %105 = tpu.memref_squeeze %104 : memref<1x!tpu.dma_semaphore, #tpu.memory_space<semaphore_mem>> -> memref<!tpu.dma_semaphore, #tpu.memory_space<semaphore_mem>>
    tpu.wait_dma2 semaphore(%105 : memref<!tpu.dma_semaphore, #tpu.memory_space<semaphore_mem>>) src(%101 : memref<32xf32, #tpu.memory_space<any>>) dst(%103 : memref<32xf32, #tpu.memory_space<vmem>>)
    %c7_i32_52 = arith.constant 7 : i32
    %c7_i32_53 = arith.constant 7 : i32
    %c0_i32_54 = arith.constant 0 : i32
    %106 = tpu.memref_slice %arg3[%57, %c0_i32_54] : memref<64x32xf32, #tpu.memory_space<any>> -> memref<1x32xf32, #tpu.memory_space<any>>
    %107 = tpu.memref_squeeze %106 : memref<1x32xf32, #tpu.memory_space<any>> -> memref<32xf32, #tpu.memory_space<any>>
    %c0_i32_55 = arith.constant 0 : i32
    %108 = tpu.memref_slice %arg5[%c7_i32_52, %c0_i32_55] : memref<8x32xf32, #tpu.memory_space<vmem>> -> memref<1x32xf32, #tpu.memory_space<vmem>>
    %109 = tpu.memref_squeeze %108 : memref<1x32xf32, #tpu.memory_space<vmem>> -> memref<32xf32, #tpu.memory_space<vmem>>
    %110 = tpu.memref_slice %arg6[%c7_i32_53] : memref<8x!tpu.dma_semaphore, #tpu.memory_space<semaphore_mem>> -> memref<1x!tpu.dma_semaphore, #tpu.memory_space<semaphore_mem>>
    %111 = tpu.memref_squeeze %110 : memref<1x!tpu.dma_semaphore, #tpu.memory_space<semaphore_mem>> -> memref<!tpu.dma_semaphore, #tpu.memory_space<semaphore_mem>>
    tpu.wait_dma2 semaphore(%111 : memref<!tpu.dma_semaphore, #tpu.memory_space<semaphore_mem>>) src(%107 : memref<32xf32, #tpu.memory_space<any>>) dst(%109 : memref<32xf32, #tpu.memory_space<vmem>>)
    %c0_56 = arith.constant 0 : index
    %c0_57 = arith.constant 0 : index
    %112 = vector.load %arg5[%c0_56, %c0_57] : memref<8x32xf32, #tpu.memory_space<vmem>>, vector<8x32xf32>
    %c0_58 = arith.constant 0 : index
    %c0_59 = arith.constant 0 : index
    %113 = vector.load %arg2[%c0_58, %c0_59] : memref<8x32xf32, #tpu.memory_space<vmem>>, vector<8x32xf32>
    %114 = arith.addf %112, %113 : vector<8x32xf32>
    %c0_60 = arith.constant 0 : index
    %c0_61 = arith.constant 0 : index
    %c0_62 = arith.constant 0 : index
    %115 = vector.load %arg4[%c0_60, %c0_61, %c0_62] : memref<1x8x32xf32, #tpu.memory_space<vmem>>, vector<1x8x32xf32>
    %116 = vector.shape_cast %115 : vector<1x8x32xf32> to vector<8x32xf32>
    %117 = vector.shape_cast %114 : vector<8x32xf32> to vector<1x8x32xf32>
    tpu.vector_store %arg4[%c0_60, %c0_61, %c0_62], %117 {strides = array<i32>} : memref<1x8x32xf32, #tpu.memory_space<vmem>>, vector<1x8x32xf32>,
    return
  }
  func.func @transform_0(%arg0: i32, %arg1: memref<2x8xi32, #tpu.memory_space<smem>>) -> (i32, i32) {
    %c0_i32 = arith.constant 0 : i32
    %c0_i32_0 = arith.constant 0 : i32
    %c0_i32_1 = arith.constant 0 : i32
    return %c0_i32, %c0_i32_0 : i32, i32
  }
  func.func @transform_2(%arg0: i32, %arg1: memref<2x8xi32, #tpu.memory_space<smem>>) -> (i32, i32, i32) {
    %c0_i32 = arith.constant 0 : i32
    %c0_i32_0 = arith.constant 0 : i32
    %c0_i32_1 = arith.constant 0 : i32
    return %arg0, %c0_i32, %c0_i32_0 : i32, i32, i32
  }
}

</mosaic_0001>

<llo_original>
// kernel: tpu_custom_call.1
$region0: #{tpu_custom_call.1}
  #allocation0 [shape = 'u32[]', space=smem, size = 0x4, offset = 0x4, fixed_abs, tag = 'smem constant byte address 0x4 - core index']
  #allocation1 [shape = 'u32[144,128]{1,0:T(1,128)}', space=vmem, size = 0x12000, scoped, tag = 'internal scratch']
  #allocation2 [shape = 'f32[8,32]{1,0:T(8,128)}', space=vmem, size = 0x1000, scoped, tag = 'scratch operand']
  #allocation3 [shape = 's32[8]{0}', space=sflag, size = 0x20, scoped, tag = 'scratch operand']
  #allocation4 [shape = 's32[1]{0}', space=sflag, size = 0x4, scoped, tag = 'scoped memory for tpu_custom_call.1']
  #allocation5 [shape = 'u8[1024]{0}', space=smem, size = 0x400, scoped, tag = 'prefetched SMEM operand 0']
  #allocation8 [shape = 's32[]', space=sflag, size = 0x4, offset = 0, fixed_abs, tag = 'sflag constant byte address 0x0 - dummy sync flag']
  #allocation9 [shape = 's32[]', space=sflag, size = 0x4, offset = 0, fixed_abs, tag = 'sflag constant byte address 0x0 - dummy sync flag']
  #allocation10 [shape = 's32[]', space=sflag, size = 0x4, offset = 0, fixed_abs, tag = 'sflag constant byte address 0x0 - dummy sync flag']
  #allocation11 [shape = 's32[]', space=sflag, size = 0x4, offset = 0, fixed_abs, tag = 'sflag constant byte address 0x0 - dummy sync flag']
  #allocation12 [shape = 's32[]', space=sflag, size = 0x4, offset = 0, fixed_abs, tag = 'sflag constant byte address 0x0 - dummy sync flag']
  #allocation13 [shape = 's32[]', space=sflag, size = 0x4, offset = 0, fixed_abs, tag = 'sflag constant byte address 0x0 - dummy sync flag']
  #allocation14 [shape = 's32[]', space=sflag, size = 0x4, offset = 0, fixed_abs, tag = 'sflag constant byte address 0x0 - dummy sync flag']
  #allocation15 [shape = 's32[]', space=sflag, size = 0x4, offset = 0, fixed_abs, tag = 'sflag constant byte address 0x0 - dummy sync flag']
  %s0 = inlined_call_operand.vmem [shape: s32[2,8], index: 0, kind: input, shape index: {}]
  %s1 = inlined_call_operand.vmem [shape: f32[8,32], index: 1, kind: input, shape index: {}]
  %s2 = inlined_call_operand.vmem [shape: f32[64,32], index: 2, kind: input, shape index: {}]
  %s3 = inlined_call_operand.hbm [shape: f32[2,8,32], index: 3, kind: output, shape index: {}]
  %s4 = sld [smem:[#allocation0]]
  $region277: #{tpu_custom_call.1} parent=0
    _
  %s6 = ssub.s32 1, %s4
  %s7 = scalar_select 0, %s6, %s4
  %s8 = sshll.u32 %s0, 4
  %s9 = int_to_ptr.vmem [resolvable:$true] %s8
  %11 = dma.vmem_to_smem %s9, 32, [#allocation5], [#allocation4]
  %12 = dma.done [#allocation4], 32
  %13 = sfence
  $region1: #{tpu_custom_call.1} parent=0
    #allocation6 [shape = 'u8[8192]{0}', space=vmem, size = 0x2000, scoped, tag = 'output window, operand 0']
    #allocation7 [shape = 's32[2]{0}', space=sflag, size = 0x8, scoped, tag = 'scoped memory for tpu_custom_call.1']
    %14 = vsyncpa [#allocation7], 0
    %s15 = scalar_lea.sflag [#allocation7], 1
    %16 = vsyncpa %s15, 0
    loop: start=0, step=1, limit=4
    $region2: #{tpu_custom_call.1} parent=1 // loop_pre_header
      _
    $region3: #{tpu_custom_call.1} parent=1 // loop_header
      %s18 = sphi 0, %s22
      %p19 = scmp.ge.s32.totalorder %s18, 4
      %s26 = sphi 0, %s26
      %s28 = sphi 0, %s26
      %s29 = sphi 0, %s28
      %s43 = sphi 0, %s29
      %s49 = sphi 0, %s51
      %s52 = sphi 0, %s49
      %s53 = sphi 0, %s52
      %s69 = sphi 0, %s53
    $region4: #{tpu_custom_call.1} parent=1 // loop_header_branch
      %21 = sbr.rel (%p19) target = $region8
    $region5: #{tpu_custom_call.1} parent=1 // loop_body
      %s23 = ssub.s32 %s18, 1
      %s24 = ssub.s32 %s18, 2
      %s25 = sadd.s32 %s18, 1
      %s27 = sadd.s32 %s26, 1
      %p30 = scmp.eq.s32.totalorder %s18, 1
      %p31 = scmp.ne.s32.totalorder %s26, %s28
      %p32 = scmp.eq.s32.totalorder %s18, 0
      %p33 = por %p31, %p32
      %p34 = scmp.ne.s32.totalorder %s26, %s28
      %p35 = scmp.eq.s32.totalorder %s23, 1
      %p36 = por %p34, %p35
      %p37 = scmp.ne.s32.totalorder %s28, %s29
      %p38 = scmp.eq.s32.totalorder %s23, 0
      %p39 = por %p37, %p38
      %p40 = scmp.ne.s32.totalorder %s28, %s29
      %p41 = scmp.eq.s32.totalorder %s24, 1
      %p42 = por %p40, %p41
      %p44 = scmp.ne.s32.totalorder %s29, %s43
      %p45 = scmp.eq.s32.totalorder %s24, 0
      %p46 = por %p44, %p45
      %s47 = ssub.s32 %s18, %s25
      %p48 = scmp.eq.s32.totalorder %s47, 0
      %s50 = sadd.s32 %s49, 1
      %s51 = scalar_select %p48, %s49, %s50
      %p54 = pneg %p48
      %p55 = scmp.eq.s32.totalorder %s18, 1
      %p56 = por %p54, %p55
      %p57 = scmp.ne.s32.totalorder %s49, %s52
      %p58 = scmp.eq.s32.totalorder %s18, 0
      %p59 = por %p57, %p58
      %p60 = scmp.ne.s32.totalorder %s49, %s52
      %p61 = scmp.eq.s32.totalorder %s23, 1
      %p62 = por %p60, %p61
      %p63 = scmp.ne.s32.totalorder %s52, %s53
      %p64 = scmp.eq.s32.totalorder %s23, 0
      %p65 = por %p63, %p64
      %p66 = scmp.ne.s32.totalorder %s52, %s53
      %p67 = scmp.eq.s32.totalorder %s24, 1
      %p68 = por %p66, %p67
      %p70 = scmp.ne.s32.totalorder %s53, %s69
      %p71 = scmp.eq.s32.totalorder %s24, 0
      %p72 = por %p70, %p71
      %p73 = scmp.le.s32.totalorder 1, %s18
      %p74 = scmp.lt.s32.totalorder %s18, 3
      %p75 = pnand %p73, %p74
      %p76 = pneg %p75
      // Predicated region
      $region9: #{tpu_custom_call.1} parent=5 // pred_check
        _
      $region10: #{tpu_custom_call.1} parent=5 // pred_check_branch
        %78 = sbr.rel (%p75) target = $region12
      $region11: #{tpu_custom_call.1} parent=5 // pred_region
        %s79 = ssub.s32 %s18, 1
        // Predicated region
        $region13: #{tpu_custom_call.1} parent=11 // pred_check
          %p80 = pneg %p39
        $region14: #{tpu_custom_call.1} parent=11 // pred_check_branch
          %82 = sbr.rel (%p80) target = $region16
        $region15: #{tpu_custom_call.1} parent=11 // pred_region
          _
        $region16: #{tpu_custom_call.1} parent=11 // pred_fallthru
          _
      $region12: #{tpu_custom_call.1} parent=5 // pred_fallthru
        _
      %p83 = scmp.lt.s32.totalorder %s18, 2
      // Predicated region
      $region17: #{tpu_custom_call.1} parent=5 // pred_check
        %p84 = pneg %p83
      $region18: #{tpu_custom_call.1} parent=5 // pred_check_branch
        %86 = sbr.rel (%p84) target = $region20
      $region19: #{tpu_custom_call.1} parent=5 // pred_region
        _
      $region20: #{tpu_custom_call.1} parent=5 // pred_fallthru
        _
      %p87 = scmp.le.s32.totalorder 1, %s18
      %p88 = scmp.lt.s32.totalorder %s18, 3
      %p89 = pnand %p87, %p88
      %p90 = pneg %p89
      // Predicated region
      $region21: #{tpu_custom_call.1} parent=5 // pred_check
        _
      $region22: #{tpu_custom_call.1} parent=5 // pred_check_branch
        %92 = sbr.rel (%p89) target = $region24
      $region23: #{tpu_custom_call.1} parent=5 // pred_region
        %s93 = ssub.s32 %s18, 1
        %p94 = pneg %p39
        %p95 = pneg %p36
        %p96 = pneg %p65
        %p97 = pneg %p62
        %s98 = sand.u32 %s52, 1
        %s99 = scalar_lea.sflag [#allocation7], %s98
        %s100 = sand.u32 %s52, 1
        %s101 = smul.addr %s100, 8
        %s102 = scalar_lea.vmem [#allocation6], %s101
        %s103 = smul.u32 %s23, 128
        %s104 = sld [smem:[#allocation5 + %s103]]
        %s105 = scalar_lea.vmem %s2, %s104
        %p107 = scmp.lt.u32.totalorder 1, 8
        %p108 = pneg %p107
        // Predicated region
        $region25: #{tpu_custom_call.1} parent=23 // pred_check
          _
        $region26: #{tpu_custom_call.1} parent=23 // pred_check_branch
          %110 = sbr.rel (%p107) target = $region28
        $region27: #{tpu_custom_call.1} parent=23 // pred_region
          %s126 = sand.u32 1, 7
          %p127 = scmp.eq.s32.totalorder %s126, 0
          %p128 = pneg %p127
          // Predicated region
          $region40: #{tpu_custom_call.1} parent=27 // pred_check
            _
          $region41: #{tpu_custom_call.1} parent=27 // pred_check_branch
            %130 = sbr.rel (%p127) target = $region43
          $region42: #{tpu_custom_call.1} parent=27 // pred_region
            %s131 = sand.u32 1, 7
            %s132 = ssub.s32 1, %s131
            %s133 = scalar_lea.vmem %s105, %s132
            %s134 = ssub.s32 1, %s131
            %s135 = scalar_lea.vmem [#allocation2], %s134
            %s136 = sshll.u32 1, %s131
            %s137 = ssub.s32 %s136, 1
            loop: start=0, step=1, limit=1
            $region44: #{tpu_custom_call.1} parent=42 // loop_pre_header
              _
            $region45: #{tpu_custom_call.1} parent=42 // loop_header
              %s139 = sphi 0, %s143
              %p140 = scmp.ge.s32.totalorder %s139, 1
              %s144 = sphi %s133, %s133
              %s145 = sphi %s135, %s135
            $region46: #{tpu_custom_call.1} parent=42 // loop_header_branch
              %142 = sbr.rel (%p140) target = $region50
            $region47: #{tpu_custom_call.1} parent=42 // loop_body
              %v146 = vld [vmem:[%s144] sm:%s137]
              %147 = vst [vmem:[%s145] sm:%s137] %v146
            $region48: #{tpu_custom_call.1} parent=42 // loop_footer
              %s143 = sadd.s32 1, %s139
            $region49: #{tpu_custom_call.1} parent=42 // loop_footer_branch
              %138 = sbr.rel target = $region45
            $region50: #{tpu_custom_call.1} parent=42 // loop_exit
              _
          $region43: #{tpu_custom_call.1} parent=27 // pred_fallthru
            _
        $region28: #{tpu_custom_call.1} parent=23 // pred_fallthru
          _
        // Predicated region
        $region29: #{tpu_custom_call.1} parent=23 // pred_check
          %p111 = pneg %p107
        $region30: #{tpu_custom_call.1} parent=23 // pred_check_branch
          %113 = sbr.rel (%p111) target = $region32
        $region31: #{tpu_custom_call.1} parent=23 // pred_region
          %s114 = sshll.u32 1, 1
          %s115 = ssub.s32 %s114, 1
          loop: start=0, step=1, limit=1
          $region33: #{tpu_custom_call.1} parent=31 // loop_pre_header
            _
          $region34: #{tpu_custom_call.1} parent=31 // loop_header
            %s117 = sphi 0, %s121
            %p118 = scmp.ge.s32.totalorder %s117, 1
            %s122 = sphi %s105, %s105
            %s123 = sphi [#allocation2], [#allocation2]
          $region35: #{tpu_custom_call.1} parent=31 // loop_header_branch
            %120 = sbr.rel (%p118) target = $region39
          $region36: #{tpu_custom_call.1} parent=31 // loop_body
            %v124 = vld [vmem:[%s122] sm:%s115]
            %125 = vst [vmem:[%s123] sm:%s115] %v124
          $region37: #{tpu_custom_call.1} parent=31 // loop_footer
            %s121 = sadd.s32 1, %s117
          $region38: #{tpu_custom_call.1} parent=31 // loop_footer_branch
            %116 = sbr.rel target = $region34
          $region39: #{tpu_custom_call.1} parent=31 // loop_exit
            _
        $region32: #{tpu_custom_call.1} parent=23 // pred_fallthru
          _
        // Predicated region
        $region51: #{tpu_custom_call.1} parent=23 // pred_check
          _
        $region52: #{tpu_custom_call.1} parent=23 // pred_check_branch
          %150 = sbr.rel (0) target = $region54
        $region53: #{tpu_custom_call.1} parent=23 // pred_region
          %151 = vsyncadd [#allocation3], 16
        $region54: #{tpu_custom_call.1} parent=23 // pred_fallthru
          _
        %s152 = sadd.s32 %s103, 1
        %s153 = sld [smem:[#allocation5 + %s152]]
        %s154 = scalar_lea.vmem %s2, %s153
        %s155 = scalar_lea.vmem [#allocation2], 1
        %s156 = scalar_lea.sflag [#allocation3], 1
        %p158 = scmp.lt.u32.totalorder 1, 8
        %p159 = pneg %p158
        // Predicated region
        $region55: #{tpu_custom_call.1} parent=23 // pred_check
          _
        $region56: #{tpu_custom_call.1} parent=23 // pred_check_branch
          %161 = sbr.rel (%p158) target = $region58
        $region57: #{tpu_custom_call.1} parent=23 // pred_region
          %s177 = sand.u32 1, 7
          %p178 = scmp.eq.s32.totalorder %s177, 0
          %p179 = pneg %p178
          // Predicated region
          $region70: #{tpu_custom_call.1} parent=57 // pred_check
            _
          $region71: #{tpu_custom_call.1} parent=57 // pred_check_branch
            %181 = sbr.rel (%p178) target = $region73
          $region72: #{tpu_custom_call.1} parent=57 // pred_region
            %s182 = sand.u32 1, 7
            %s183 = ssub.s32 1, %s182
            %s184 = scalar_lea.vmem %s154, %s183
            %s185 = ssub.s32 1, %s182
            %s186 = scalar_lea.vmem %s155, %s185 [#allocation2]
            %s187 = sshll.u32 1, %s182
            %s188 = ssub.s32 %s187, 1
            loop: start=0, step=1, limit=1
            $region74: #{tpu_custom_call.1} parent=72 // loop_pre_header
              _
            $region75: #{tpu_custom_call.1} parent=72 // loop_header
              %s190 = sphi 0, %s194
              %p191 = scmp.ge.s32.totalorder %s190, 1
              %s195 = sphi %s184, %s184
              %s196 = sphi %s186, %s186
            $region76: #{tpu_custom_call.1} parent=72 // loop_header_branch
              %193 = sbr.rel (%p191) target = $region80
            $region77: #{tpu_custom_call.1} parent=72 // loop_body
              %v197 = vld [vmem:[%s195] sm:%s188]
              %198 = vst [vmem:[%s196] sm:%s188] %v197
            $region78: #{tpu_custom_call.1} parent=72 // loop_footer
              %s194 = sadd.s32 1, %s190
            $region79: #{tpu_custom_call.1} parent=72 // loop_footer_branch
              %189 = sbr.rel target = $region75
            $region80: #{tpu_custom_call.1} parent=72 // loop_exit
              _
          $region73: #{tpu_custom_call.1} parent=57 // pred_fallthru
            _
        $region58: #{tpu_custom_call.1} parent=23 // pred_fallthru
          _
        // Predicated region
        $region59: #{tpu_custom_call.1} parent=23 // pred_check
          %p162 = pneg %p158
        $region60: #{tpu_custom_call.1} parent=23 // pred_check_branch
          %164 = sbr.rel (%p162) target = $region62
        $region61: #{tpu_custom_call.1} parent=23 // pred_region
          %s165 = sshll.u32 1, 1
          %s166 = ssub.s32 %s165, 1
          loop: start=0, step=1, limit=1
          $region63: #{tpu_custom_call.1} parent=61 // loop_pre_header
            _
          $region64: #{tpu_custom_call.1} parent=61 // loop_header
            %s168 = sphi 0, %s172
            %p169 = scmp.ge.s32.totalorder %s168, 1
            %s173 = sphi %s154, %s154
            %s174 = sphi %s155, %s155
          $region65: #{tpu_custom_call.1} parent=61 // loop_header_branch
            %171 = sbr.rel (%p169) target = $region69
          $region66: #{tpu_custom_call.1} parent=61 // loop_body
            %v175 = vld [vmem:[%s173] sm:%s166]
            %176 = vst [vmem:[%s174] sm:%s166] %v175
          $region67: #{tpu_custom_call.1} parent=61 // loop_footer
            %s172 = sadd.s32 1, %s168
          $region68: #{tpu_custom_call.1} parent=61 // loop_footer_branch
            %167 = sbr.rel target = $region64
          $region69: #{tpu_custom_call.1} parent=61 // loop_exit
            _
        $region62: #{tpu_custom_call.1} parent=23 // pred_fallthru
          _
        // Predicated region
        $region81: #{tpu_custom_call.1} parent=23 // pred_check
          _
        $region82: #{tpu_custom_call.1} parent=23 // pred_check_branch
          %201 = sbr.rel (0) target = $region84
        $region83: #{tpu_custom_call.1} parent=23 // pred_region
          %202 = vsyncadd %s156, 16
        $region84: #{tpu_custom_call.1} parent=23 // pred_fallthru
          _
        %s203 = sadd.s32 %s103, 2
        %s204 = sld [smem:[#allocation5 + %s203]]
        %s205 = scalar_lea.vmem %s2, %s204
        %s206 = scalar_lea.vmem [#allocation2], 2
        %s207 = scalar_lea.sflag [#allocation3], 2
        %p209 = scmp.lt.u32.totalorder 1, 8
        %p210 = pneg %p209
        // Predicated region
        $region85: #{tpu_custom_call.1} parent=23 // pred_check
          _
        $region86: #{tpu_custom_call.1} parent=23 // pred_check_branch
          %212 = sbr.rel (%p209) target = $region88
        $region87: #{tpu_custom_call.1} parent=23 // pred_region
          %s228 = sand.u32 1, 7
          %p229 = scmp.eq.s32.totalorder %s228, 0
          %p230 = pneg %p229
          // Predicated region
          $region100: #{tpu_custom_call.1} parent=87 // pred_check
            _
          $region101: #{tpu_custom_call.1} parent=87 // pred_check_branch
            %232 = sbr.rel (%p229) target = $region103
          $region102: #{tpu_custom_call.1} parent=87 // pred_region
            %s233 = sand.u32 1, 7
            %s234 = ssub.s32 1, %s233
            %s235 = scalar_lea.vmem %s205, %s234
            %s236 = ssub.s32 1, %s233
            %s237 = scalar_lea.vmem %s206, %s236 [#allocation2]
            %s238 = sshll.u32 1, %s233
            %s239 = ssub.s32 %s238, 1
            loop: start=0, step=1, limit=1
            $region104: #{tpu_custom_call.1} parent=102 // loop_pre_header
              _
            $region105: #{tpu_custom_call.1} parent=102 // loop_header
              %s241 = sphi 0, %s245
              %p242 = scmp.ge.s32.totalorder %s241, 1
              %s246 = sphi %s235, %s235
              %s247 = sphi %s237, %s237
            $region106: #{tpu_custom_call.1} parent=102 // loop_header_branch
              %244 = sbr.rel (%p242) target = $region110
            $region107: #{tpu_custom_call.1} parent=102 // loop_body
              %v248 = vld [vmem:[%s246] sm:%s239]
              %249 = vst [vmem:[%s247] sm:%s239] %v248
            $region108: #{tpu_custom_call.1} parent=102 // loop_footer
              %s245 = sadd.s32 1, %s241
            $region109: #{tpu_custom_call.1} parent=102 // loop_footer_branch
              %240 = sbr.rel target = $region105
            $region110: #{tpu_custom_call.1} parent=102 // loop_exit
              _
          $region103: #{tpu_custom_call.1} parent=87 // pred_fallthru
            _
        $region88: #{tpu_custom_call.1} parent=23 // pred_fallthru
          _
        // Predicated region
        $region89: #{tpu_custom_call.1} parent=23 // pred_check
          %p213 = pneg %p209
        $region90: #{tpu_custom_call.1} parent=23 // pred_check_branch
          %215 = sbr.rel (%p213) target = $region92
        $region91: #{tpu_custom_call.1} parent=23 // pred_region
          %s216 = sshll.u32 1, 1
          %s217 = ssub.s32 %s216, 1
          loop: start=0, step=1, limit=1
          $region93: #{tpu_custom_call.1} parent=91 // loop_pre_header
            _
          $region94: #{tpu_custom_call.1} parent=91 // loop_header
            %s219 = sphi 0, %s223
            %p220 = scmp.ge.s32.totalorder %s219, 1
            %s224 = sphi %s205, %s205
            %s225 = sphi %s206, %s206
          $region95: #{tpu_custom_call.1} parent=91 // loop_header_branch
            %222 = sbr.rel (%p220) target = $region99
          $region96: #{tpu_custom_call.1} parent=91 // loop_body
            %v226 = vld [vmem:[%s224] sm:%s217]
            %227 = vst [vmem:[%s225] sm:%s217] %v226
          $region97: #{tpu_custom_call.1} parent=91 // loop_footer
            %s223 = sadd.s32 1, %s219
          $region98: #{tpu_custom_call.1} parent=91 // loop_footer_branch
            %218 = sbr.rel target = $region94
          $region99: #{tpu_custom_call.1} parent=91 // loop_exit
            _
        $region92: #{tpu_custom_call.1} parent=23 // pred_fallthru
          _
        // Predicated region
        $region111: #{tpu_custom_call.1} parent=23 // pred_check
          _
        $region112: #{tpu_custom_call.1} parent=23 // pred_check_branch
          %252 = sbr.rel (0) target = $region114
        $region113: #{tpu_custom_call.1} parent=23 // pred_region
          %253 = vsyncadd %s207, 16
        $region114: #{tpu_custom_call.1} parent=23 // pred_fallthru
          _
        %s254 = sadd.s32 %s103, 3
        %s255 = sld [smem:[#allocation5 + %s254]]
        %s256 = scalar_lea.vmem %s2, %s255
        %s257 = scalar_lea.vmem [#allocation2], 3
        %s258 = scalar_lea.sflag [#allocation3], 3
        %p260 = scmp.lt.u32.totalorder 1, 8
        %p261 = pneg %p260
        // Predicated region
        $region115: #{tpu_custom_call.1} parent=23 // pred_check
          _
        $region116: #{tpu_custom_call.1} parent=23 // pred_check_branch
          %263 = sbr.rel (%p260) target = $region118
        $region117: #{tpu_custom_call.1} parent=23 // pred_region
          %s279 = sand.u32 1, 7
          %p280 = scmp.eq.s32.totalorder %s279, 0
          %p281 = pneg %p280
          // Predicated region
          $region130: #{tpu_custom_call.1} parent=117 // pred_check
            _
          $region131: #{tpu_custom_call.1} parent=117 // pred_check_branch
            %283 = sbr.rel (%p280) target = $region133
          $region132: #{tpu_custom_call.1} parent=117 // pred_region
            %s284 = sand.u32 1, 7
            %s285 = ssub.s32 1, %s284
            %s286 = scalar_lea.vmem %s256, %s285
            %s287 = ssub.s32 1, %s284
            %s288 = scalar_lea.vmem %s257, %s287 [#allocation2]
            %s289 = sshll.u32 1, %s284
            %s290 = ssub.s32 %s289, 1
            loop: start=0, step=1, limit=1
            $region134: #{tpu_custom_call.1} parent=132 // loop_pre_header
              _
            $region135: #{tpu_custom_call.1} parent=132 // loop_header
              %s292 = sphi 0, %s296
              %p293 = scmp.ge.s32.totalorder %s292, 1
              %s297 = sphi %s286, %s286
              %s298 = sphi %s288, %s288
            $region136: #{tpu_custom_call.1} parent=132 // loop_header_branch
              %295 = sbr.rel (%p293) target = $region140
            $region137: #{tpu_custom_call.1} parent=132 // loop_body
              %v299 = vld [vmem:[%s297] sm:%s290]
              %300 = vst [vmem:[%s298] sm:%s290] %v299
            $region138: #{tpu_custom_call.1} parent=132 // loop_footer
              %s296 = sadd.s32 1, %s292
            $region139: #{tpu_custom_call.1} parent=132 // loop_footer_branch
              %291 = sbr.rel target = $region135
            $region140: #{tpu_custom_call.1} parent=132 // loop_exit
              _
          $region133: #{tpu_custom_call.1} parent=117 // pred_fallthru
            _
        $region118: #{tpu_custom_call.1} parent=23 // pred_fallthru
          _
        // Predicated region
        $region119: #{tpu_custom_call.1} parent=23 // pred_check
          %p264 = pneg %p260
        $region120: #{tpu_custom_call.1} parent=23 // pred_check_branch
          %266 = sbr.rel (%p264) target = $region122
        $region121: #{tpu_custom_call.1} parent=23 // pred_region
          %s267 = sshll.u32 1, 1
          %s268 = ssub.s32 %s267, 1
          loop: start=0, step=1, limit=1
          $region123: #{tpu_custom_call.1} parent=121 // loop_pre_header
            _
          $region124: #{tpu_custom_call.1} parent=121 // loop_header
            %s270 = sphi 0, %s274
            %p271 = scmp.ge.s32.totalorder %s270, 1
            %s275 = sphi %s256, %s256
            %s276 = sphi %s257, %s257
          $region125: #{tpu_custom_call.1} parent=121 // loop_header_branch
            %273 = sbr.rel (%p271) target = $region129
          $region126: #{tpu_custom_call.1} parent=121 // loop_body
            %v277 = vld [vmem:[%s275] sm:%s268]
            %278 = vst [vmem:[%s276] sm:%s268] %v277
          $region127: #{tpu_custom_call.1} parent=121 // loop_footer
            %s274 = sadd.s32 1, %s270
          $region128: #{tpu_custom_call.1} parent=121 // loop_footer_branch
            %269 = sbr.rel target = $region124
          $region129: #{tpu_custom_call.1} parent=121 // loop_exit
            _
        $region122: #{tpu_custom_call.1} parent=23 // pred_fallthru
          _
        // Predicated region
        $region141: #{tpu_custom_call.1} parent=23 // pred_check
          _
        $region142: #{tpu_custom_call.1} parent=23 // pred_check_branch
          %303 = sbr.rel (0) target = $region144
        $region143: #{tpu_custom_call.1} parent=23 // pred_region
          %304 = vsyncadd %s258, 16
        $region144: #{tpu_custom_call.1} parent=23 // pred_fallthru
          _
        %s305 = sadd.s32 %s103, 4
        %s306 = sld [smem:[#allocation5 + %s305]]
        %s307 = scalar_lea.vmem %s2, %s306
        %s308 = scalar_lea.vmem [#allocation2], 4
        %s309 = scalar_lea.sflag [#allocation3], 4
        %p311 = scmp.lt.u32.totalorder 1, 8
        %p312 = pneg %p311
        // Predicated region
        $region145: #{tpu_custom_call.1} parent=23 // pred_check
          _
        $region146: #{tpu_custom_call.1} parent=23 // pred_check_branch
          %314 = sbr.rel (%p311) target = $region148
        $region147: #{tpu_custom_call.1} parent=23 // pred_region
          %s330 = sand.u32 1, 7
          %p331 = scmp.eq.s32.totalorder %s330, 0
          %p332 = pneg %p331
          // Predicated region
          $region160: #{tpu_custom_call.1} parent=147 // pred_check
            _
          $region161: #{tpu_custom_call.1} parent=147 // pred_check_branch
            %334 = sbr.rel (%p331) target = $region163
          $region162: #{tpu_custom_call.1} parent=147 // pred_region
            %s335 = sand.u32 1, 7
            %s336 = ssub.s32 1, %s335
            %s337 = scalar_lea.vmem %s307, %s336
            %s338 = ssub.s32 1, %s335
            %s339 = scalar_lea.vmem %s308, %s338 [#allocation2]
            %s340 = sshll.u32 1, %s335
            %s341 = ssub.s32 %s340, 1
            loop: start=0, step=1, limit=1
            $region164: #{tpu_custom_call.1} parent=162 // loop_pre_header
              _
            $region165: #{tpu_custom_call.1} parent=162 // loop_header
              %s343 = sphi 0, %s347
              %p344 = scmp.ge.s32.totalorder %s343, 1
              %s348 = sphi %s337, %s337
              %s349 = sphi %s339, %s339
            $region166: #{tpu_custom_call.1} parent=162 // loop_header_branch
              %346 = sbr.rel (%p344) target = $region170
            $region167: #{tpu_custom_call.1} parent=162 // loop_body
              %v350 = vld [vmem:[%s348] sm:%s341]
              %351 = vst [vmem:[%s349] sm:%s341] %v350
            $region168: #{tpu_custom_call.1} parent=162 // loop_footer
              %s347 = sadd.s32 1, %s343
            $region169: #{tpu_custom_call.1} parent=162 // loop_footer_branch
              %342 = sbr.rel target = $region165
            $region170: #{tpu_custom_call.1} parent=162 // loop_exit
              _
          $region163: #{tpu_custom_call.1} parent=147 // pred_fallthru
            _
        $region148: #{tpu_custom_call.1} parent=23 // pred_fallthru
          _
        // Predicated region
        $region149: #{tpu_custom_call.1} parent=23 // pred_check
          %p315 = pneg %p311
        $region150: #{tpu_custom_call.1} parent=23 // pred_check_branch
          %317 = sbr.rel (%p315) target = $region152
        $region151: #{tpu_custom_call.1} parent=23 // pred_region
          %s318 = sshll.u32 1, 1
          %s319 = ssub.s32 %s318, 1
          loop: start=0, step=1, limit=1
          $region153: #{tpu_custom_call.1} parent=151 // loop_pre_header
            _
          $region154: #{tpu_custom_call.1} parent=151 // loop_header
            %s321 = sphi 0, %s325
            %p322 = scmp.ge.s32.totalorder %s321, 1
            %s326 = sphi %s307, %s307
            %s327 = sphi %s308, %s308
          $region155: #{tpu_custom_call.1} parent=151 // loop_header_branch
            %324 = sbr.rel (%p322) target = $region159
          $region156: #{tpu_custom_call.1} parent=151 // loop_body
            %v328 = vld [vmem:[%s326] sm:%s319]
            %329 = vst [vmem:[%s327] sm:%s319] %v328
          $region157: #{tpu_custom_call.1} parent=151 // loop_footer
            %s325 = sadd.s32 1, %s321
          $region158: #{tpu_custom_call.1} parent=151 // loop_footer_branch
            %320 = sbr.rel target = $region154
          $region159: #{tpu_custom_call.1} parent=151 // loop_exit
            _
        $region152: #{tpu_custom_call.1} parent=23 // pred_fallthru
          _
        // Predicated region
        $region171: #{tpu_custom_call.1} parent=23 // pred_check
          _
        $region172: #{tpu_custom_call.1} parent=23 // pred_check_branch
          %354 = sbr.rel (0) target = $region174
        $region173: #{tpu_custom_call.1} parent=23 // pred_region
          %355 = vsyncadd %s309, 16
        $region174: #{tpu_custom_call.1} parent=23 // pred_fallthru
          _
        %s356 = sadd.s32 %s103, 5
        %s357 = sld [smem:[#allocation5 + %s356]]
        %s358 = scalar_lea.vmem %s2, %s357
        %s359 = scalar_lea.vmem [#allocation2], 5
        %s360 = scalar_lea.sflag [#allocation3], 5
        %p362 = scmp.lt.u32.totalorder 1, 8
        %p363 = pneg %p362
        // Predicated region
        $region175: #{tpu_custom_call.1} parent=23 // pred_check
          _
        $region176: #{tpu_custom_call.1} parent=23 // pred_check_branch
          %365 = sbr.rel (%p362) target = $region178
        $region177: #{tpu_custom_call.1} parent=23 // pred_region
          %s381 = sand.u32 1, 7
          %p382 = scmp.eq.s32.totalorder %s381, 0
          %p383 = pneg %p382
          // Predicated region
          $region190: #{tpu_custom_call.1} parent=177 // pred_check
            _
          $region191: #{tpu_custom_call.1} parent=177 // pred_check_branch
            %385 = sbr.rel (%p382) target = $region193
          $region192: #{tpu_custom_call.1} parent=177 // pred_region
            %s386 = sand.u32 1, 7
            %s387 = ssub.s32 1, %s386
            %s388 = scalar_lea.vmem %s358, %s387
            %s389 = ssub.s32 1, %s386
            %s390 = scalar_lea.vmem %s359, %s389 [#allocation2]
            %s391 = sshll.u32 1, %s386
            %s392 = ssub.s32 %s391, 1
            loop: start=0, step=1, limit=1
            $region194: #{tpu_custom_call.1} parent=192 // loop_pre_header
              _
            $region195: #{tpu_custom_call.1} parent=192 // loop_header
              %s394 = sphi 0, %s398
              %p395 = scmp.ge.s32.totalorder %s394, 1
              %s399 = sphi %s388, %s388
              %s400 = sphi %s390, %s390
            $region196: #{tpu_custom_call.1} parent=192 // loop_header_branch
              %397 = sbr.rel (%p395) target = $region200
            $region197: #{tpu_custom_call.1} parent=192 // loop_body
              %v401 = vld [vmem:[%s399] sm:%s392]
              %402 = vst [vmem:[%s400] sm:%s392] %v401
            $region198: #{tpu_custom_call.1} parent=192 // loop_footer
              %s398 = sadd.s32 1, %s394
            $region199: #{tpu_custom_call.1} parent=192 // loop_footer_branch
              %393 = sbr.rel target = $region195
            $region200: #{tpu_custom_call.1} parent=192 // loop_exit
              _
          $region193: #{tpu_custom_call.1} parent=177 // pred_fallthru
            _
        $region178: #{tpu_custom_call.1} parent=23 // pred_fallthru
          _
        // Predicated region
        $region179: #{tpu_custom_call.1} parent=23 // pred_check
          %p366 = pneg %p362
        $region180: #{tpu_custom_call.1} parent=23 // pred_check_branch
          %368 = sbr.rel (%p366) target = $region182
        $region181: #{tpu_custom_call.1} parent=23 // pred_region
          %s369 = sshll.u32 1, 1
          %s370 = ssub.s32 %s369, 1
          loop: start=0, step=1, limit=1
          $region183: #{tpu_custom_call.1} parent=181 // loop_pre_header
            _
          $region184: #{tpu_custom_call.1} parent=181 // loop_header
            %s372 = sphi 0, %s376
            %p373 = scmp.ge.s32.totalorder %s372, 1
            %s377 = sphi %s358, %s358
            %s378 = sphi %s359, %s359
          $region185: #{tpu_custom_call.1} parent=181 // loop_header_branch
            %375 = sbr.rel (%p373) target = $region189
          $region186: #{tpu_custom_call.1} parent=181 // loop_body
            %v379 = vld [vmem:[%s377] sm:%s370]
            %380 = vst [vmem:[%s378] sm:%s370] %v379
          $region187: #{tpu_custom_call.1} parent=181 // loop_footer
            %s376 = sadd.s32 1, %s372
          $region188: #{tpu_custom_call.1} parent=181 // loop_footer_branch
            %371 = sbr.rel target = $region184
          $region189: #{tpu_custom_call.1} parent=181 // loop_exit
            _
        $region182: #{tpu_custom_call.1} parent=23 // pred_fallthru
          _
        // Predicated region
        $region201: #{tpu_custom_call.1} parent=23 // pred_check
          _
        $region202: #{tpu_custom_call.1} parent=23 // pred_check_branch
          %405 = sbr.rel (0) target = $region204
        $region203: #{tpu_custom_call.1} parent=23 // pred_region
          %406 = vsyncadd %s360, 16
        $region204: #{tpu_custom_call.1} parent=23 // pred_fallthru
          _
        %s407 = sadd.s32 %s103, 6
        %s408 = sld [smem:[#allocation5 + %s407]]
        %s409 = scalar_lea.vmem %s2, %s408
        %s410 = scalar_lea.vmem [#allocation2], 6
        %s411 = scalar_lea.sflag [#allocation3], 6
        %p413 = scmp.lt.u32.totalorder 1, 8
        %p414 = pneg %p413
        // Predicated region
        $region205: #{tpu_custom_call.1} parent=23 // pred_check
          _
        $region206: #{tpu_custom_call.1} parent=23 // pred_check_branch
          %416 = sbr.rel (%p413) target = $region208
        $region207: #{tpu_custom_call.1} parent=23 // pred_region
          %s432 = sand.u32 1, 7
          %p433 = scmp.eq.s32.totalorder %s432, 0
          %p434 = pneg %p433
          // Predicated region
          $region220: #{tpu_custom_call.1} parent=207 // pred_check
            _
          $region221: #{tpu_custom_call.1} parent=207 // pred_check_branch
            %436 = sbr.rel (%p433) target = $region223
          $region222: #{tpu_custom_call.1} parent=207 // pred_region
            %s437 = sand.u32 1, 7
            %s438 = ssub.s32 1, %s437
            %s439 = scalar_lea.vmem %s409, %s438
            %s440 = ssub.s32 1, %s437
            %s441 = scalar_lea.vmem %s410, %s440 [#allocation2]
            %s442 = sshll.u32 1, %s437
            %s443 = ssub.s32 %s442, 1
            loop: start=0, step=1, limit=1
            $region224: #{tpu_custom_call.1} parent=222 // loop_pre_header
              _
            $region225: #{tpu_custom_call.1} parent=222 // loop_header
              %s445 = sphi 0, %s449
              %p446 = scmp.ge.s32.totalorder %s445, 1
              %s450 = sphi %s439, %s439
              %s451 = sphi %s441, %s441
            $region226: #{tpu_custom_call.1} parent=222 // loop_header_branch
              %448 = sbr.rel (%p446) target = $region230
            $region227: #{tpu_custom_call.1} parent=222 // loop_body
              %v452 = vld [vmem:[%s450] sm:%s443]
              %453 = vst [vmem:[%s451] sm:%s443] %v452
            $region228: #{tpu_custom_call.1} parent=222 // loop_footer
              %s449 = sadd.s32 1, %s445
            $region229: #{tpu_custom_call.1} parent=222 // loop_footer_branch
              %444 = sbr.rel target = $region225
            $region230: #{tpu_custom_call.1} parent=222 // loop_exit
              _
          $region223: #{tpu_custom_call.1} parent=207 // pred_fallthru
            _
        $region208: #{tpu_custom_call.1} parent=23 // pred_fallthru
          _
        // Predicated region
        $region209: #{tpu_custom_call.1} parent=23 // pred_check
          %p417 = pneg %p413
        $region210: #{tpu_custom_call.1} parent=23 // pred_check_branch
          %419 = sbr.rel (%p417) target = $region212
        $region211: #{tpu_custom_call.1} parent=23 // pred_region
          %s420 = sshll.u32 1, 1
          %s421 = ssub.s32 %s420, 1
          loop: start=0, step=1, limit=1
          $region213: #{tpu_custom_call.1} parent=211 // loop_pre_header
            _
          $region214: #{tpu_custom_call.1} parent=211 // loop_header
            %s423 = sphi 0, %s427
            %p424 = scmp.ge.s32.totalorder %s423, 1
            %s428 = sphi %s409, %s409
            %s429 = sphi %s410, %s410
          $region215: #{tpu_custom_call.1} parent=211 // loop_header_branch
            %426 = sbr.rel (%p424) target = $region219
          $region216: #{tpu_custom_call.1} parent=211 // loop_body
            %v430 = vld [vmem:[%s428] sm:%s421]
            %431 = vst [vmem:[%s429] sm:%s421] %v430
          $region217: #{tpu_custom_call.1} parent=211 // loop_footer
            %s427 = sadd.s32 1, %s423
          $region218: #{tpu_custom_call.1} parent=211 // loop_footer_branch
            %422 = sbr.rel target = $region214
          $region219: #{tpu_custom_call.1} parent=211 // loop_exit
            _
        $region212: #{tpu_custom_call.1} parent=23 // pred_fallthru
          _
        // Predicated region
        $region231: #{tpu_custom_call.1} parent=23 // pred_check
          _
        $region232: #{tpu_custom_call.1} parent=23 // pred_check_branch
          %456 = sbr.rel (0) target = $region234
        $region233: #{tpu_custom_call.1} parent=23 // pred_region
          %457 = vsyncadd %s411, 16
        $region234: #{tpu_custom_call.1} parent=23 // pred_fallthru
          _
        %s458 = sadd.s32 %s103, 7
        %s459 = sld [smem:[#allocation5 + %s458]]
        %s460 = scalar_lea.vmem %s2, %s459
        %s461 = scalar_lea.vmem [#allocation2], 7
        %s462 = scalar_lea.sflag [#allocation3], 7
        %p464 = scmp.lt.u32.totalorder 1, 8
        %p465 = pneg %p464
        // Predicated region
        $region235: #{tpu_custom_call.1} parent=23 // pred_check
          _
        $region236: #{tpu_custom_call.1} parent=23 // pred_check_branch
          %467 = sbr.rel (%p464) target = $region238
        $region237: #{tpu_custom_call.1} parent=23 // pred_region
          %s483 = sand.u32 1, 7
          %p484 = scmp.eq.s32.totalorder %s483, 0
          %p485 = pneg %p484
          // Predicated region
          $region250: #{tpu_custom_call.1} parent=237 // pred_check
            _
          $region251: #{tpu_custom_call.1} parent=237 // pred_check_branch
            %487 = sbr.rel (%p484) target = $region253
          $region252: #{tpu_custom_call.1} parent=237 // pred_region
            %s488 = sand.u32 1, 7
            %s489 = ssub.s32 1, %s488
            %s490 = scalar_lea.vmem %s460, %s489
            %s491 = ssub.s32 1, %s488
            %s492 = scalar_lea.vmem %s461, %s491 [#allocation2]
            %s493 = sshll.u32 1, %s488
            %s494 = ssub.s32 %s493, 1
            loop: start=0, step=1, limit=1
            $region254: #{tpu_custom_call.1} parent=252 // loop_pre_header
              _
            $region255: #{tpu_custom_call.1} parent=252 // loop_header
              %s496 = sphi 0, %s500
              %p497 = scmp.ge.s32.totalorder %s496, 1
              %s501 = sphi %s490, %s490
              %s502 = sphi %s492, %s492
            $region256: #{tpu_custom_call.1} parent=252 // loop_header_branch
              %499 = sbr.rel (%p497) target = $region260
            $region257: #{tpu_custom_call.1} parent=252 // loop_body
              %v503 = vld [vmem:[%s501] sm:%s494]
              %504 = vst [vmem:[%s502] sm:%s494] %v503
            $region258: #{tpu_custom_call.1} parent=252 // loop_footer
              %s500 = sadd.s32 1, %s496
            $region259: #{tpu_custom_call.1} parent=252 // loop_footer_branch
              %495 = sbr.rel target = $region255
            $region260: #{tpu_custom_call.1} parent=252 // loop_exit
              _
          $region253: #{tpu_custom_call.1} parent=237 // pred_fallthru
            _
        $region238: #{tpu_custom_call.1} parent=23 // pred_fallthru
          _
        // Predicated region
        $region239: #{tpu_custom_call.1} parent=23 // pred_check
          %p468 = pneg %p464
        $region240: #{tpu_custom_call.1} parent=23 // pred_check_branch
          %470 = sbr.rel (%p468) target = $region242
        $region241: #{tpu_custom_call.1} parent=23 // pred_region
          %s471 = sshll.u32 1, 1
          %s472 = ssub.s32 %s471, 1
          loop: start=0, step=1, limit=1
          $region243: #{tpu_custom_call.1} parent=241 // loop_pre_header
            _
          $region244: #{tpu_custom_call.1} parent=241 // loop_header
            %s474 = sphi 0, %s478
            %p475 = scmp.ge.s32.totalorder %s474, 1
            %s479 = sphi %s460, %s460
            %s480 = sphi %s461, %s461
          $region245: #{tpu_custom_call.1} parent=241 // loop_header_branch
            %477 = sbr.rel (%p475) target = $region249
          $region246: #{tpu_custom_call.1} parent=241 // loop_body
            %v481 = vld [vmem:[%s479] sm:%s472]
            %482 = vst [vmem:[%s480] sm:%s472] %v481
          $region247: #{tpu_custom_call.1} parent=241 // loop_footer
            %s478 = sadd.s32 1, %s474
          $region248: #{tpu_custom_call.1} parent=241 // loop_footer_branch
            %473 = sbr.rel target = $region244
          $region249: #{tpu_custom_call.1} parent=241 // loop_exit
            _
        $region242: #{tpu_custom_call.1} parent=23 // pred_fallthru
          _
        // Predicated region
        $region261: #{tpu_custom_call.1} parent=23 // pred_check
          _
        $region262: #{tpu_custom_call.1} parent=23 // pred_check_branch
          %507 = sbr.rel (0) target = $region264
        $region263: #{tpu_custom_call.1} parent=23 // pred_region
          %508 = vsyncadd %s462, 16
        $region264: #{tpu_custom_call.1} parent=23 // pred_fallthru
          _
        %510 = dma.done [#allocation3], 16
        %512 = dma.done %s156, 16
        %514 = dma.done %s207, 16
        %516 = dma.done %s258, 16
        %518 = dma.done %s309, 16
        %520 = dma.done %s360, 16
        %522 = dma.done %s411, 16
        %524 = dma.done %s462, 16
        %v525 = vld [vmem:[#allocation2] sm:$0xff]
        %v526 = vld [vmem:[%s1] sm:$0xff]
        %v527 = vadd.f32 %v525, %v526
        %vm528 = vcmask 261120
        %529 = vst.msk [vmem:[%s102] sm:$0xff] %vm528, %v527
        %s530 = sand.u32 %s52, 1
        %s531 = scalar_lea.sflag [#allocation7], %s530
        %s532 = sand.u32 %s52, 1
        %s533 = smul.addr %s532, 8
        %s534 = scalar_lea.vmem [#allocation6], %s533
        // Predicated region
        $region265: #{tpu_custom_call.1} parent=23 // pred_check
          %p535 = pneg %p62
        $region266: #{tpu_custom_call.1} parent=23 // pred_check_branch
          %537 = sbr.rel (%p535) target = $region268
        $region267: #{tpu_custom_call.1} parent=23 // pred_region
          %s539 = ssub.s32 128, 128
          %540 = vsyncadd %s531, %s539
          %s541 = smul.addr %s23, 128
          %s542 = scalar_lea.hbm %s3, %s541
          %s544 = sshll.u32 %s534, 4
          %s545 = int_to_ptr.vmem [resolvable:$true] %s544
          %547 = dma.vmem_to_hbm [thread:$0]  %s545, 128, %s542, %s531
        $region268: #{tpu_custom_call.1} parent=23 // pred_fallthru
          _
      $region24: #{tpu_custom_call.1} parent=5 // pred_fallthru
        _
      %p548 = scmp.le.s32.totalorder 2, %s18
      // Predicated region
      $region269: #{tpu_custom_call.1} parent=5 // pred_check
        %p549 = pneg %p548
      $region270: #{tpu_custom_call.1} parent=5 // pred_check_branch
        %551 = sbr.rel (%p549) target = $region272
      $region271: #{tpu_custom_call.1} parent=5 // pred_region
        %s552 = ssub.s32 %s18, 2
        // Predicated region
        $region273: #{tpu_custom_call.1} parent=271 // pred_check
          %p553 = pneg %p68
        $region274: #{tpu_custom_call.1} parent=271 // pred_check_branch
          %555 = sbr.rel (%p553) target = $region276
        $region275: #{tpu_custom_call.1} parent=271 // pred_region
          %s556 = sand.u32 %s53, 1
          %s557 = scalar_lea.sflag [#allocation7], %s556
          %s558 = sand.u32 %s53, 1
          %s559 = smul.addr %s558, 8
          %s560 = scalar_lea.vmem [#allocation6], %s559
          %561 = dma.done %s557, 128
        $region276: #{tpu_custom_call.1} parent=271 // pred_fallthru
          _
      $region272: #{tpu_custom_call.1} parent=5 // pred_fallthru
        _
    $region6: #{tpu_custom_call.1} parent=1 // loop_footer
      %s22 = sadd.s32 1, %s18
    $region7: #{tpu_custom_call.1} parent=1 // loop_footer_branch
      %17 = sbr.rel target = $region3
    $region8: #{tpu_custom_call.1} parent=1 // loop_exit
      _
    %562 = vsyncpa [#allocation7], 1
    %s563 = scalar_lea.sflag [#allocation7], 1
    %564 = vsyncpa %s563, 1
  %565 = vsyncmov [#allocation3]
  %s566 = vpop.sfrf %565
  %p567 = scmp.eq.s32.totalorder %s566, 0
  %p568 = pneg %p567
  %570 = shalt.err (%p568)
  %s571 = scalar_lea.sflag [#allocation3], 1
  %572 = vsyncmov %s571
  %s573 = vpop.sfrf %572
  %p574 = scmp.eq.s32.totalorder %s573, 0
  %p575 = pneg %p574
  %577 = shalt.err (%p575)
  %s578 = scalar_lea.sflag [#allocation3], 2
  %579 = vsyncmov %s578
  %s580 = vpop.sfrf %579
  %p581 = scmp.eq.s32.totalorder %s580, 0
  %p582 = pneg %p581
  %584 = shalt.err (%p582)
  %s585 = scalar_lea.sflag [#allocation3], 3
  %586 = vsyncmov %s585
  %s587 = vpop.sfrf %586
  %p588 = scmp.eq.s32.totalorder %s587, 0
  %p589 = pneg %p588
  %591 = shalt.err (%p589)
  %s592 = scalar_lea.sflag [#allocation3], 4
  %593 = vsyncmov %s592
  %s594 = vpop.sfrf %593
  %p595 = scmp.eq.s32.totalorder %s594, 0
  %p596 = pneg %p595
  %598 = shalt.err (%p596)
  %s599 = scalar_lea.sflag [#allocation3], 5
  %600 = vsyncmov %s599
  %s601 = vpop.sfrf %600
  %p602 = scmp.eq.s32.totalorder %s601, 0
  %p603 = pneg %p602
  %605 = shalt.err (%p603)
  %s606 = scalar_lea.sflag [#allocation3], 6
  %607 = vsyncmov %s606
  %s608 = vpop.sfrf %607
  %p609 = scmp.eq.s32.totalorder %s608, 0
  %p610 = pneg %p609
  %612 = shalt.err (%p610)
  %s613 = scalar_lea.sflag [#allocation3], 7
  %614 = vsyncmov %s613
  %s615 = vpop.sfrf %614
  %p616 = scmp.eq.s32.totalorder %s615, 0
  %p617 = pneg %p616
  %619 = shalt.err (%p617)

</llo_original>
